<compile_context>
chip_gen: v6e
topology: v6e:2x2x1
jax: 0.10.0
libtpu: 0.0.40
codegen_flags: <defaults>
</compile_context>

<pallas_src>
import jax
import jax.numpy as jnp
from jax import lax
from jax.experimental import pallas as pl
from jax.experimental.pallas import tpu as pltpu

C = 16          # channels (fixed by the module)
GROUPS = 2
CG = C // GROUPS
KH = KW = 3     # conv2 kernel
STRIDE = 2
PAD = 1


# ----------------------------------------------------------------------------
# Kernel: out = x + x @ W_big + b_big          (single matmul + add + store)
# ----------------------------------------------------------------------------
def fused_kernel(x_ref, w_ref, b_ref, o_ref):
    # x_ref: (N, H*W*C)   w_ref: (H*W*C, H*W*C)   b_ref: (1, H*W*C)
    x = x_ref[...]
    y = jnp.dot(x, w_ref[...], preferred_element_type=jnp.float32)
    o_ref[...] = x + y + b_ref[...]


def run_model_pallas(x_nhwc, w_big, b_big):
    N, H, W, Cc = x_nhwc.shape
    assert Cc == C
    x_flat = x_nhwc.reshape(N, H * W * C)           # lane-dense layout (glue)

    vmem = pl.BlockSpec(memory_space=pltpu.MemorySpace.VMEM)
    out_flat = pl.pallas_call(
        fused_kernel,
        out_shape=jax.ShapeDtypeStruct((N, H * W * C), jnp.float32),
        in_specs=[vmem, vmem, vmem],
        out_specs=vmem,
    )(x_flat, w_big, b_big)
    return out_flat.reshape(N, H, W, C)


# ----------------------------------------------------------------------------
# Wrapper-side algebra: fold conv1, the effective conv2 taps, both biases and
# the spatial broadcast into a single (H*W*C, H*W*C) weight + (1, H*W*C) bias.
# Exact for H, W in {1, 2} (the only sizes for which the torch forward runs).
# ----------------------------------------------------------------------------
def build_fused_params(w1, b1, w2, b2, H, W):
    assert 1 <= H <= 2 and 1 <= W <= 2, (
        "fused specialization (and the torch residual broadcast) requires H,W <= 2")
    HW = H * W

    # conv1 block-diagonal [out, in]
    w1_full = jnp.zeros((C, C), jnp.float32)
    for g in range(GROUPS):
        w1_full = w1_full.at[g * CG:(g + 1) * CG,
                             g * CG:(g + 1) * CG].set(w1[g * CG:(g + 1) * CG, :, 0, 0])

    # per-pixel fused matrices: pixel (h, w) is hit only by conv2 tap (h+1, w+1)
    wc = jnp.zeros((HW * C, C), jnp.float32)        # [pixel*in, out]
    w2_sum = jnp.zeros((C, C), jnp.float32)
    for h in range(H):
        for w in range(W):
            w2_tap = jnp.zeros((C, C), jnp.float32)  # [out, in], block-diagonal
            for g in range(GROUPS):
                w2_tap = w2_tap.at[g * CG:(g + 1) * CG,
                                   g * CG:(g + 1) * CG].set(
                    w2[g * CG:(g + 1) * CG, :, h + 1, w + 1])
            m = w2_tap @ w1_full                     # [out, in]
            p = h * W + w
            wc = wc.at[p * C:(p + 1) * C, :].set(m.T)
            w2_sum = w2_sum + w2_tap

    b_eff = b2 + w2_sum @ b1                         # (C,)

    # fold the spatial broadcast of the 1x1 conv2 output over x1
    w_big = jnp.tile(wc, (1, HW))                    # (HW*C, HW*C)
    b_big = jnp.tile(b_eff, HW).reshape(1, HW * C)   # (1, HW*C)
    return w_big, b_big


# ----------------------------------------------------------------------------
# Deterministic params with PyTorch Conv2d shapes and a lax.conv reference.
# ----------------------------------------------------------------------------
def make_params(key):
    k1, k2, k3, k4 = jax.random.split(key, 4)
    fan1 = CG * 1 * 1
    fan2 = CG * KH * KW
    w1 = jax.random.uniform(k1, (C, CG, 1, 1), jnp.float32,
                            -1.0 / jnp.sqrt(fan1), 1.0 / jnp.sqrt(fan1))
    b1 = jax.random.uniform(k2, (C,), jnp.float32,
                            -1.0 / jnp.sqrt(fan1), 1.0 / jnp.sqrt(fan1))
    w2 = jax.random.uniform(k3, (C, CG, KH, KW), jnp.float32,
                            -1.0 / jnp.sqrt(fan2), 1.0 / jnp.sqrt(fan2))
    b2 = jax.random.uniform(k4, (C,), jnp.float32,
                            -1.0 / jnp.sqrt(fan2), 1.0 / jnp.sqrt(fan2))
    return w1, b1, w2, b2


def ref_forward_nchw(x, w1, b1, w2, b2):
    dn = ('NCHW', 'OIHW', 'NCHW')
    v1 = lax.conv_general_dilated(x, w1, (1, 1), 'VALID',
                                  feature_group_count=GROUPS,
                                  dimension_numbers=dn) + b1[None, :, None, None]
    v3 = lax.conv_general_dilated(v1, w2, (STRIDE, STRIDE),
                                  ((PAD, PAD), (PAD, PAD)),
                                  feature_group_count=GROUPS,
                                  dimension_numbers=dn) + b2[None, :, None, None]
    return v3 + x


if __name__ == "__main__":
    key = jax.random.PRNGKey(0)
    kx, kp = jax.random.split(key)

    # Small shapes consistent with the module: N=2, C=16, H=W=2
    # (the only spatial sizes for which the torch forward is broadcast-valid).
    N, H, W = 2, 2, 2
    x_nchw = jax.random.normal(kx, (N, C, H, W), jnp.float32)

    w1, b1, w2, b2 = make_params(kp)
    w_big, b_big = build_fused_params(w1, b1, w2, b2, H, W)

    x_nhwc = jnp.transpose(x_nchw, (0, 2, 3, 1))

    # x2, x3, x4 of the torch forward are unused; the kernel ignores them.
    out_nhwc = run_model_pallas(x_nhwc, w_big, b_big)
    out_nhwc = jax.block_until_ready(out_nhwc)

    ref = ref_forward_nchw(x_nchw, w1, b1, w2, b2)
    ref_nhwc = jnp.transpose(ref, (0, 2, 3, 1))

    assert out_nhwc.shape == (N, H, W, C)
    assert jnp.allclose(out_nhwc, ref_nhwc, atol=1e-4, rtol=1e-4), (
        "mismatch vs lax.conv reference")

    print("KERNEL_OK")
</pallas_src>

<mosaic_0001>
module attributes {stable_mosaic.version = 11 : i64} {
  func.func @fused_kernel(%arg0: memref<2x64xf32, #tpu.memory_space<vmem>>, %arg1: memref<64x64xf32, #tpu.memory_space<vmem>>, %arg2: memref<1x64xf32, #tpu.memory_space<vmem>>, %arg3: memref<2x64xf32, #tpu.memory_space<vmem>>) attributes {dimension_semantics = [], scalar_prefetch = 0 : i64, scratch_operands = 0 : i64, tpu.core_type = #tpu.core_type<tc>} {
    %c0 = arith.constant 0 : index
    %c0_0 = arith.constant 0 : index
    %0 = vector.load %arg0[%c0, %c0_0] : memref<2x64xf32, #tpu.memory_space<vmem>>, vector<2x64xf32>
    %c0_1 = arith.constant 0 : index
    %c0_2 = arith.constant 0 : index
    %1 = vector.load %arg1[%c0_1, %c0_2] : memref<64x64xf32, #tpu.memory_space<vmem>>, vector<64x64xf32>
    %cst = arith.constant dense<0.000000e+00> : vector<2x64xf32>
    %2 = tpu.matmul %0, %1, %cst {dimension_numbers = #tpu.dot_dimension_numbers<[1], [0], [0], [1], [0, 0, 1, 1], [], []>} : vector<2x64xf32>, vector<64x64xf32>, vector<2x64xf32> -> vector<2x64xf32>
    %3 = arith.addf %0, %2 : vector<2x64xf32>
    %c0_3 = arith.constant 0 : index
    %c0_4 = arith.constant 0 : index
    %4 = vector.load %arg2[%c0_3, %c0_4] : memref<1x64xf32, #tpu.memory_space<vmem>>, vector<1x64xf32>
    %5 = vector.broadcast %4 : vector<1x64xf32> to vector<2x64xf32>
    %6 = arith.addf %3, %5 : vector<2x64xf32>
    %c0_5 = arith.constant 0 : index
    %c0_6 = arith.constant 0 : index
    %7 = vector.load %arg3[%c0_5, %c0_6] : memref<2x64xf32, #tpu.memory_space<vmem>>, vector<2x64xf32>
    tpu.vector_store %arg3[%c0_5, %c0_6], %6 {strides = array<i32>} : memref<2x64xf32, #tpu.memory_space<vmem>>, vector<2x64xf32>,
    return
  }
}

</mosaic_0001>

<llo_original>
// kernel: tpu_custom_call.1
$region0: #{tpu_custom_call.1}
  #allocation0 [shape = 'u32[]', space=smem, size = 0x4, offset = 0x4, fixed_abs, tag = 'smem constant byte address 0x4 - core index']
  #allocation1 [shape = 'u32[144,128]{1,0:T(1,128)}', space=vmem, size = 0x12000, scoped, tag = 'internal scratch']
  %s0 = inlined_call_operand.hbm [shape: f32[2,64], index: 0, kind: input, shape index: {}]
  %s1 = inlined_call_operand.hbm [shape: f32[64,64], index: 1, kind: input, shape index: {}]
  %s2 = inlined_call_operand.vmem [shape: f32[1,64], index: 2, kind: input, shape index: {}]
  %s3 = inlined_call_operand.hbm [shape: f32[2,64], index: 3, kind: output, shape index: {}]
  %s4 = sld [smem:[#allocation0]]
  $region30: #{tpu_custom_call.1} parent=0
    _
  %s6 = ssub.s32 1, %s4
  %s7 = scalar_select 0, %s6, %s4
  $region1: #{tpu_custom_call.1} parent=0
    #allocation2 [shape = 'u8[1024]{0}', space=vmem, size = 0x400, scoped, tag = 'input window, operand 0, single buffered']
    #allocation3 [shape = 's32[1]{0}', space=sflag, size = 0x4, scoped, tag = 'scoped memory for tpu_custom_call.1']
    #allocation4 [shape = 's32[1]{0}', space=sflag, size = 0x4, scoped, tag = 'scoped memory for tpu_custom_call.1']
    #allocation5 [shape = 'u8[32768]{0}', space=vmem, size = 0x8000, scoped, tag = 'input window, operand 1, single buffered']
    #allocation6 [shape = 's32[1]{0}', space=sflag, size = 0x4, scoped, tag = 'scoped memory for tpu_custom_call.1']
    #allocation7 [shape = 'u8[1024]{0}', space=vmem, size = 0x400, scoped, tag = 'output window, operand 0, single buffered']
    %8 = vsyncpa [#allocation3], 0
    %9 = vsyncpa [#allocation6], 0
    %10 = vsyncpa [#allocation4], 0
    // Predicated region
    $region2: #{tpu_custom_call.1} parent=1 // pred_check
      _
    $region3: #{tpu_custom_call.1} parent=1 // pred_check_branch
      %12 = sbr.rel (0) target = $region5
    $region4: #{tpu_custom_call.1} parent=1 // pred_region
      %s14 = ssub.s32 32, 32
      %15 = vsyncadd [#allocation3], %s14
      %s17 = sshll.u32 [#allocation2], 4
      %s18 = int_to_ptr.vmem [resolvable:$true] %s17
      %20 = dma.hbm_to_vmem [thread:$0]  %s0, 32, %s18, [#allocation3]
    $region5: #{tpu_custom_call.1} parent=1 // pred_fallthru
      _
    // Predicated region
    $region6: #{tpu_custom_call.1} parent=1 // pred_check
      _
    $region7: #{tpu_custom_call.1} parent=1 // pred_check_branch
      %22 = sbr.rel (0) target = $region9
    $region8: #{tpu_custom_call.1} parent=1 // pred_region
      %s24 = ssub.s32 1024, 1024
      %25 = vsyncadd [#allocation6], %s24
      %s26 = sshll.u32 [#allocation5], 4
      %s27 = int_to_ptr.vmem [resolvable:$true] %s26
      %32 = dma.hbm_to_vmem [thread:$0]  %s1, 1024, %s27, [#allocation6], 128, 128, 8
    $region9: #{tpu_custom_call.1} parent=1 // pred_fallthru
      _
    // Predicated region
    $region10: #{tpu_custom_call.1} parent=1 // pred_check
      _
    $region11: #{tpu_custom_call.1} parent=1 // pred_check_branch
      %34 = sbr.rel (0) target = $region13
    $region12: #{tpu_custom_call.1} parent=1 // pred_region
      _
    $region13: #{tpu_custom_call.1} parent=1 // pred_fallthru
      _
    // Predicated region
    $region14: #{tpu_custom_call.1} parent=1 // pred_check
      _
    $region15: #{tpu_custom_call.1} parent=1 // pred_check_branch
      %36 = sbr.rel (0) target = $region17
    $region16: #{tpu_custom_call.1} parent=1 // pred_region
      %37 = dma.done [#allocation3], 32
    $region17: #{tpu_custom_call.1} parent=1 // pred_fallthru
      _
    // Predicated region
    $region18: #{tpu_custom_call.1} parent=1 // pred_check
      _
    $region19: #{tpu_custom_call.1} parent=1 // pred_check_branch
      %39 = sbr.rel (0) target = $region21
    $region20: #{tpu_custom_call.1} parent=1 // pred_region
      %40 = dma.done [#allocation6], 1024
    $region21: #{tpu_custom_call.1} parent=1 // pred_fallthru
      _
    %v41 = vld [vmem:[#allocation2] sm:$0x3]
    %v42 = vld [vmem:[#allocation5] sm:$0xff]
    %v43 = vld [vmem:[#allocation5 + $0x8] sm:$0xff]
    %v44 = vld [vmem:[#allocation5 + $0x10] sm:$0xff]
    %v45 = vld [vmem:[#allocation5 + $0x18] sm:$0xff]
    %v46 = vld [vmem:[#allocation5 + $0x20] sm:$0xff]
    %v47 = vld [vmem:[#allocation5 + $0x28] sm:$0xff]
    %v48 = vld [vmem:[#allocation5 + $0x30] sm:$0xff]
    %v49 = vld [vmem:[#allocation5 + $0x38] sm:$0xff]
    %vm50 = vcmask 523264
    %v52 = vsel %vm50, %v41, 0
    %54 = vmatprep.subr.mxu0 0.0
    %55 = vmatpush1.msra.mxu0 0.0
    %56 = vmatprep.subr.mxu0 0.0
    %57 = vmatpush1.msra.mxu0 0.0
    %58 = vmatprep.subr.mxu0 0.0
    %59 = vmatpush1.msra.mxu0 0.0
    %60 = vmatprep.subr.mxu0 0.0
    %61 = vmatpush1.msra.mxu0 0.0
    %62 = vmatprep.subr.mxu0 0.0
    %63 = vmatpush1.msra.mxu0 0.0
    %64 = vmatprep.subr.mxu0 0.0
    %65 = vmatpush1.msra.mxu0 0.0
    %66 = vmatprep.subr.mxu0 0.0
    %67 = vmatpush1.msra.mxu0 0.0
    %68 = vmatprep.subr.mxu0 0.0
    %69 = vmatpush1.msra.mxu0 0.0
    %70 = vmatprep.subr.mxu0 0.0
    %71 = vmatpush1.msra.mxu0 %v49
    %72 = vmatprep.subr.mxu0 0.0
    %73 = vmatpush1.msra.mxu0 %v48
    %74 = vmatprep.subr.mxu0 0.0
    %75 = vmatpush1.msra.mxu0 %v47
    %76 = vmatprep.subr.mxu0 0.0
    %77 = vmatpush1.msra.mxu0 %v46
    %78 = vmatprep.subr.mxu0 0.0
    %79 = vmatpush1.msra.mxu0 %v45
    %80 = vmatprep.subr.mxu0 0.0
    %81 = vmatpush1.msra.mxu0 %v44
    %82 = vmatprep.subr.mxu0 0.0
    %83 = vmatpush1.msra.mxu0 %v43
    %84 = vmatprep.subr.mxu0 0.0
    %85 = vmatpush1.msra.mxu0 %v42
    %86 = vmatprep.subr.mxu0 0.0
    %87 = vmatpush2.msra.mxu0 0.0
    %88 = vmatprep.subr.mxu0 0.0
    %89 = vmatpush2.msra.mxu0 0.0
    %90 = vmatprep.subr.mxu0 0.0
    %91 = vmatpush2.msra.mxu0 0.0
    %92 = vmatprep.subr.mxu0 0.0
    %93 = vmatpush2.msra.mxu0 0.0
    %94 = vmatprep.subr.mxu0 0.0
    %95 = vmatpush2.msra.mxu0 0.0
    %96 = vmatprep.subr.mxu0 0.0
    %97 = vmatpush2.msra.mxu0 0.0
    %98 = vmatprep.subr.mxu0 0.0
    %99 = vmatpush2.msra.mxu0 0.0
    %100 = vmatprep.subr.mxu0 0.0
    %101 = vmatpush2.msra.mxu0 0.0
    %102 = vmatprep.subr.mxu0 0.0
    %103 = vmatpush2.msra.mxu0 0.0
    %104 = vmatprep.subr.mxu0 0.0
    %105 = vmatpush2.msra.mxu0 0.0
    %106 = vmatprep.subr.mxu0 0.0
    %107 = vmatpush2.msra.mxu0 0.0
    %108 = vmatprep.subr.mxu0 0.0
    %109 = vmatpush2.msra.mxu0 0.0
    %110 = vmatprep.subr.mxu0 0.0
    %111 = vmatpush2.msra.mxu0 0.0
    %112 = vmatprep.subr.mxu0 0.0
    %113 = vmatpush2.msra.mxu0 0.0
    %114 = vmatprep.subr.mxu0 0.0
    %115 = vmatpush2.msra.mxu0 0.0
    %116 = vmatprep.subr.mxu0 0.0
    %117 = vmatpush2.msra.mxu0 0.0
    %118 = vmatprep.mubr.f32.mxu0 0.0
    %119 = vmatmul.mubr.f32.gmra.mxu0 %v52
    %v120 = vpop.f32.mrf.mxu0
    %v121 = vadd.f32 0.0, %v120
    %v122 = vpop.f32.mrf.mxu0
    %123 = vdwg.mxu0
    %v124 = vadd.f32 %v41, %v121
    %v125 = vld [vmem:[%s2] sm:$0x1]
    %v127 = vlaneseq
    %v128 = vshrl.u32 %v127, 7
    %v129 = vsub.s32 0, %v128
    %v130 = vrot.slane %v125, %v129
    %v132 = vadd.f32 %v124, %v130
    %vm133 = vcmask 517120
    %134 = vst.msk [vmem:[#allocation7] sm:$0x3] %vm133, %v132
    // Predicated region
    $region22: #{tpu_custom_call.1} parent=1 // pred_check
      _
    $region23: #{tpu_custom_call.1} parent=1 // pred_check_branch
      %136 = sbr.rel (0) target = $region25
    $region24: #{tpu_custom_call.1} parent=1 // pred_region
      %s138 = ssub.s32 32, 32
      %139 = vsyncadd [#allocation4], %s138
      %s141 = sshll.u32 [#allocation7], 4
      %s142 = int_to_ptr.vmem [resolvable:$true] %s141
      %144 = dma.vmem_to_hbm [thread:$0]  %s142, 32, %s3, [#allocation4]
    $region25: #{tpu_custom_call.1} parent=1 // pred_fallthru
      _
    // Predicated region
    $region26: #{tpu_custom_call.1} parent=1 // pred_check
      _
    $region27: #{tpu_custom_call.1} parent=1 // pred_check_branch
      %146 = sbr.rel (0) target = $region29
    $region28: #{tpu_custom_call.1} parent=1 // pred_region
      %147 = dma.done [#allocation4], 32
    $region29: #{tpu_custom_call.1} parent=1 // pred_fallthru
      _
    %148 = vsyncpa [#allocation3], 1
    %149 = vsyncpa [#allocation6], 1
    %150 = vsyncpa [#allocation4], 1

</llo_original>
